<compile_context>
chip_gen: v7x
topology: tpu7x:2x2x1
jax: 0.10.0
libtpu: 0.0.40
codegen_flags: <defaults>
</compile_context>

<pallas_src>
import functools

import jax
import jax.numpy as jnp
from jax.experimental import pallas as pl
from jax.experimental.pallas import tpu as pltpu


def _clp_kernel(r_ref, i_ref, wpr_ref, wpi_ref, bias_ref, o_ref, *, C):
    """r_ref/i_ref/o_ref: (C, TL); wpr/wpi: (2C, C); bias: (2C, 1)."""
    # Packed accumulator: rows [0:C) = out_real channels, [C:2C) = out_imag.
    # Two tiny MXU dots + lane-broadcast bias; f32 accumulate, full precision.
    acc = (
        jnp.dot(wpr_ref[...], r_ref[...],
                preferred_element_type=jnp.float32,
                precision=jax.lax.Precision.HIGHEST)
        + jnp.dot(wpi_ref[...], i_ref[...],
                  preferred_element_type=jnp.float32,
                  precision=jax.lax.Precision.HIGHEST)
        + bias_ref[...]
    )
    sq = acc * acc
    mag = jnp.sqrt(sq[:C, :] + sq[C:, :] + jnp.float32(1e-8))
    o_ref[...] = mag.astype(o_ref.dtype)


@functools.partial(jax.jit, static_argnames=("max_tl",))
def complex_linear_projection(real, imag, w_real, w_imag, *, max_tl=16384):
    """real, imag: (B, C, F, T); w_real, w_imag: (C_out, C_in) 1x1 conv weights."""
    B, C, F, T = real.shape
    L = F * T

    # Lane tiling: blocks of 128 lanes, tile capped at max_tl, and enough grid
    # steps (B*nl >= ~8 when the problem allows) so both v7x TensorCores work.
    lane_blocks = pl.cdiv(L, 128)
    max_blocks = max(1, max_tl // 128)
    min_tiles = max(pl.cdiv(lane_blocks, max_blocks),
                    min(lane_blocks, pl.cdiv(8, B)))
    tl = pl.cdiv(lane_blocks, min_tiles) * 128
    nl = pl.cdiv(L, tl)

    # Metadata-only reshape (contiguous): no transpose, no pad, no extra HBM pass.
    r3 = real.reshape(B, C, L)
    i3 = imag.reshape(B, C, L)

    # Packed weight columns (tiny, wrapper-side): rows [0:C) produce out_real,
    # rows [C:2C) produce out_imag.
    wr = w_real.astype(jnp.float32)
    wi = w_imag.astype(jnp.float32)
    wp_r = jnp.concatenate([wr, wi], axis=0)        # multiplies real-input rows
    wp_i = jnp.concatenate([-wi, wr], axis=0)       # multiplies imag-input rows
    # Hoisted epsilon: eps * (rowsum(Wr) - rowsum(Wi)) only affects out_real.
    bias = jnp.float32(1e-10) * jnp.concatenate(
        [wr.sum(axis=1) - wi.sum(axis=1), jnp.zeros((C,), jnp.float32)]
    ).reshape(2 * C, 1)

    out3 = pl.pallas_call(
        functools.partial(_clp_kernel, C=C),
        out_shape=jax.ShapeDtypeStruct((B, C, L), real.dtype),
        grid_spec=pltpu.PrefetchScalarGridSpec(
            num_scalar_prefetch=0,
            grid=(B, nl),
            in_specs=[
                pl.BlockSpec((None, C, tl), lambda b, j: (b, 0, j)),   # real
                pl.BlockSpec((None, C, tl), lambda b, j: (b, 0, j)),   # imag
                pl.BlockSpec((2 * C, C), lambda b, j: (0, 0)),         # wp_r
                pl.BlockSpec((2 * C, C), lambda b, j: (0, 0)),         # wp_i
                pl.BlockSpec((2 * C, 1), lambda b, j: (0, 0)),         # bias
            ],
            out_specs=pl.BlockSpec((None, C, tl), lambda b, j: (b, 0, j)),
        ),
        compiler_params=pltpu.CompilerParams(
            dimension_semantics=("parallel", "parallel"),
        ),
    )(r3, i3, wp_r, wp_i, bias)

    return out3.reshape(B, C, F, T)


def _reference(real, imag, w_real, w_imag):
    """Pure-JAX reference matching the PyTorch module (1x1 conv = einsum)."""
    conv = lambda w, x: jnp.einsum("oc,bcft->boft", w, x)
    r2r = conv(w_real, real + 1e-10)
    i2i = conv(w_imag, imag + 1e-10)
    r2i = conv(w_imag, real)
    i2r = conv(w_real, imag)
    out_real = r2r - i2i
    out_imag = r2i + i2r
    return jnp.sqrt(out_real**2 + out_imag**2 + 1e-8)


if __name__ == "__main__":
    # B=2, per-part channels C=4 (ComplexConv2d cin=2C=8), F=16 bins, T=8 frames.
    B, C, F, T = 2, 4, 16, 8
    key = jax.random.PRNGKey(0)
    k_r, k_i, k_wr, k_wi = jax.random.split(key, 4)

    real = jax.random.normal(k_r, (B, C, F, T), dtype=jnp.float32)
    imag = jax.random.normal(k_i, (B, C, F, T), dtype=jnp.float32)
    w_real = 0.05 * jax.random.normal(k_wr, (C, C), dtype=jnp.float32)
    w_imag = 0.05 * jax.random.normal(k_wi, (C, C), dtype=jnp.float32)

    out = jax.block_until_ready(
        complex_linear_projection(real, imag, w_real, w_imag))
    ref = _reference(real, imag, w_real, w_imag)
    assert out.shape == (B, C, F, T)
    assert jnp.allclose(out, ref, atol=1e-5, rtol=1e-5), "mismatch vs reference"

    # Non-multiple F*T exercises the ragged (masked) last lane block path.
    F2, T2 = 5, 7
    real2 = jax.random.normal(k_r, (B, C, F2, T2), dtype=jnp.float32)
    imag2 = jax.random.normal(k_i, (B, C, F2, T2), dtype=jnp.float32)
    out2 = jax.block_until_ready(
        complex_linear_projection(real2, imag2, w_real, w_imag))
    ref2 = _reference(real2, imag2, w_real, w_imag)
    assert out2.shape == (B, C, F2, T2)
    assert jnp.allclose(out2, ref2, atol=1e-5, rtol=1e-5), "tail mismatch"

    print("KERNEL_OK")
</pallas_src>

<mosaic_0001>
module attributes {stable_mosaic.version = 11 : i64} {
  func.func @_clp_kernel(%arg0: i32, %arg1: i32, %arg2: memref<1x4x128xf32, #tpu.memory_space<vmem>>, %arg3: memref<1x4x128xf32, #tpu.memory_space<vmem>>, %arg4: memref<8x4xf32, #tpu.memory_space<vmem>>, %arg5: memref<8x4xf32, #tpu.memory_space<vmem>>, %arg6: memref<8x1xf32, #tpu.memory_space<vmem>>, %arg7: memref<1x4x128xf32, #tpu.memory_space<vmem>>) attributes {dimension_semantics = [#tpu.dimension_semantics<parallel>, #tpu.dimension_semantics<parallel>], iteration_bounds = array<i64: 2, 1>, scalar_prefetch = 0 : i64, scratch_operands = 0 : i64, tpu.core_type = #tpu.core_type<tc>, window_params = [{transform_indices = @transform_0, window_bounds = array<i64: 1, 4, 128>}, {transform_indices = @transform_1, window_bounds = array<i64: 1, 4, 128>}, {pipeline_mode = #tpu.pipeline_mode<synchronous>, transform_indices = @transform_2, window_bounds = array<i64: 8, 4>}, {pipeline_mode = #tpu.pipeline_mode<synchronous>, transform_indices = @transform_3, window_bounds = array<i64: 8, 4>}, {pipeline_mode = #tpu.pipeline_mode<synchronous>, transform_indices = @transform_4, window_bounds = array<i64: 8, 1>}, {transform_indices = @transform_5, window_bounds = array<i64: 1, 4, 128>}]} {
    %c0 = arith.constant 0 : index
    %c0_0 = arith.constant 0 : index
    %0 = vector.load %arg4[%c0, %c0_0] : memref<8x4xf32, #tpu.memory_space<vmem>>, vector<8x4xf32>
    %c0_1 = arith.constant 0 : index
    %c0_2 = arith.constant 0 : index
    %c0_3 = arith.constant 0 : index
    %1 = vector.load %arg2[%c0_1, %c0_2, %c0_3] : memref<1x4x128xf32, #tpu.memory_space<vmem>>, vector<1x4x128xf32>
    %2 = vector.shape_cast %1 : vector<1x4x128xf32> to vector<4x128xf32>
    %cst = arith.constant dense<0.000000e+00> : vector<8x128xf32>
    %3 = tpu.matmul %0, %2, %cst {dimension_numbers = #tpu.dot_dimension_numbers<[1], [0], [0], [1], [0, 0, 1, 1], [], []>, precision = #tpu.contract_precision<fp32>} : vector<8x4xf32>, vector<4x128xf32>, vector<8x128xf32> -> vector<8x128xf32>
    %c0_4 = arith.constant 0 : index
    %c0_5 = arith.constant 0 : index
    %4 = vector.load %arg5[%c0_4, %c0_5] : memref<8x4xf32, #tpu.memory_space<vmem>>, vector<8x4xf32>
    %c0_6 = arith.constant 0 : index
    %c0_7 = arith.constant 0 : index
    %c0_8 = arith.constant 0 : index
    %5 = vector.load %arg3[%c0_6, %c0_7, %c0_8] : memref<1x4x128xf32, #tpu.memory_space<vmem>>, vector<1x4x128xf32>
    %6 = vector.shape_cast %5 : vector<1x4x128xf32> to vector<4x128xf32>
    %cst_9 = arith.constant dense<0.000000e+00> : vector<8x128xf32>
    %7 = tpu.matmul %4, %6, %cst_9 {dimension_numbers = #tpu.dot_dimension_numbers<[1], [0], [0], [1], [0, 0, 1, 1], [], []>, precision = #tpu.contract_precision<fp32>} : vector<8x4xf32>, vector<4x128xf32>, vector<8x128xf32> -> vector<8x128xf32>
    %8 = arith.addf %3, %7 : vector<8x128xf32>
    %c0_10 = arith.constant 0 : index
    %c0_11 = arith.constant 0 : index
    %9 = vector.load %arg6[%c0_10, %c0_11] : memref<8x1xf32, #tpu.memory_space<vmem>>, vector<8x1xf32>
    %10 = vector.broadcast %9 : vector<8x1xf32> to vector<8x128xf32>
    %11 = arith.addf %8, %10 : vector<8x128xf32>
    %12 = arith.mulf %11, %11 : vector<8x128xf32>
    %13 = vector.extract_strided_slice %12 {offsets = [0, 0], sizes = [4, 128], strides = [1, 1]} : vector<8x128xf32> to vector<4x128xf32>
    %14 = vector.extract_strided_slice %12 {offsets = [4, 0], sizes = [4, 128], strides = [1, 1]} : vector<8x128xf32> to vector<4x128xf32>
    %15 = arith.addf %13, %14 : vector<4x128xf32>
    %cst_12 = arith.constant 9.99999993E-9 : f32
    %16 = vector.broadcast %cst_12 : f32 to vector<4x128xf32>
    %17 = arith.addf %15, %16 : vector<4x128xf32>
    %18 = math.sqrt %17 : vector<4x128xf32>
    %c0_13 = arith.constant 0 : index
    %c0_14 = arith.constant 0 : index
    %c0_15 = arith.constant 0 : index
    %19 = vector.load %arg7[%c0_13, %c0_14, %c0_15] : memref<1x4x128xf32, #tpu.memory_space<vmem>>, vector<1x4x128xf32>
    %20 = vector.shape_cast %19 : vector<1x4x128xf32> to vector<4x128xf32>
    %21 = vector.shape_cast %18 : vector<4x128xf32> to vector<1x4x128xf32>
    tpu.vector_store %arg7[%c0_13, %c0_14, %c0_15], %21 {strides = array<i32>} : memref<1x4x128xf32, #tpu.memory_space<vmem>>, vector<1x4x128xf32>,
    return
  }
  func.func @transform_0(%arg0: i32, %arg1: i32) -> (i32, i32, i32) {
    %c0_i32 = arith.constant 0 : i32
    %c0_i32_0 = arith.constant 0 : i32
    return %arg0, %c0_i32, %arg1 : i32, i32, i32
  }
  func.func @transform_1(%arg0: i32, %arg1: i32) -> (i32, i32, i32) {
    %c0_i32 = arith.constant 0 : i32
    %c0_i32_0 = arith.constant 0 : i32
    return %arg0, %c0_i32, %arg1 : i32, i32, i32
  }
  func.func @transform_2(%arg0: i32, %arg1: i32) -> (i32, i32) {
    %c0_i32 = arith.constant 0 : i32
    %c0_i32_0 = arith.constant 0 : i32
    %c0_i32_1 = arith.constant 0 : i32
    return %c0_i32, %c0_i32_0 : i32, i32
  }
  func.func @transform_3(%arg0: i32, %arg1: i32) -> (i32, i32) {
    %c0_i32 = arith.constant 0 : i32
    %c0_i32_0 = arith.constant 0 : i32
    %c0_i32_1 = arith.constant 0 : i32
    return %c0_i32, %c0_i32_0 : i32, i32
  }
  func.func @transform_4(%arg0: i32, %arg1: i32) -> (i32, i32) {
    %c0_i32 = arith.constant 0 : i32
    %c0_i32_0 = arith.constant 0 : i32
    %c0_i32_1 = arith.constant 0 : i32
    return %c0_i32, %c0_i32_0 : i32, i32
  }
  func.func @transform_5(%arg0: i32, %arg1: i32) -> (i32, i32, i32) {
    %c0_i32 = arith.constant 0 : i32
    %c0_i32_0 = arith.constant 0 : i32
    return %arg0, %c0_i32, %arg1 : i32, i32, i32
  }
}

</mosaic_0001>

<llo_original>
// kernel: sub.1
$region0: #{sub.1}
  #allocation0 [shape = 's32[1]{0}', space=sflag, size = 0x4, scoped, tag = 'scoped memory for sub.1']
  %s0 = inlined_call_operand.vmem [shape: f32[4], index: 0, kind: input, shape index: {}]
  %s1 = inlined_call_operand.vmem [shape: f32[4], index: 1, kind: input, shape index: {}]
  %s2 = inlined_call_operand.vmem [shape: f32[4], index: 2, kind: output, shape index: {}]
  %v3 = vld [vmem:[%s0] sm:$0x1]
  %v4 = vld [vmem:[%s1] sm:$0x1]
  %5 = xla_tuple %v3, %v4
  %6 = xla_tuple %5
  %v7 = vsub.f32 %v3, %v4
  %8 = xla_tuple %v7
  %9 = vst [vmem:[%s2] sm:$0x1] %v7

// kernel: complex_linear_projection.1
$region0: #{complex_linear_projection.1}
  #allocation0 [shape = 'u32[]', space=smem, size = 0x4, offset = 0x4, fixed_abs, tag = 'smem constant byte address 0x4 - core index']
  #allocation1 [shape = 'u32[144,128]{1,0:T(1,128)}', space=vmem, size = 0x12000, scoped, tag = 'internal scratch']
  %s0 = inlined_call_operand.vmem [shape: f32[2,4,128], index: 0, kind: input, shape index: {}]
  %s1 = inlined_call_operand.vmem [shape: f32[2,4,128], index: 1, kind: input, shape index: {}]
  %s2 = inlined_call_operand.vmem [shape: f32[8,4], index: 2, kind: input, shape index: {}]
  %s3 = inlined_call_operand.vmem [shape: f32[8,4], index: 3, kind: input, shape index: {}]
  %s4 = inlined_call_operand.vmem [shape: f32[8,1], index: 4, kind: input, shape index: {}]
  %s5 = inlined_call_operand.vmem [shape: f32[2,4,128], index: 5, kind: output, shape index: {}]
  %s6 = sld [smem:[#allocation0]]
  $region53: #{complex_linear_projection.1} parent=0
    _
  %s8 = ssub.s32 1, %s6
  %s9 = scalar_select 0, %s8, %s6
  loop: start=0, step=1, limit=4
  $region2: #{complex_linear_projection.1} parent=0 // loop_pre_header
    _
  $region3: #{complex_linear_projection.1} parent=0 // loop_header
    %s11 = sphi 0, %s15
    %p12 = scmp.ge.s32.totalorder %s11, 4
    %s18 = sphi 0, %s30
    %s19 = sphi 0, %s26
    %s20 = sphi 0, %s18
    %s21 = sphi 0, %s19
    %s22 = sphi 0, %s20
    %s23 = sphi 0, %s21
    %s35 = sphi 0, %s37
    %s38 = sphi 0, %s35
    %s39 = sphi 0, %s38
    %s55 = sphi 0, %s39
    %s63 = sphi 0, %s65
    %s66 = sphi 0, %s63
    %s67 = sphi 0, %s66
    %s83 = sphi 0, %s67
    %s87 = sphi 0, %s87
    %s89 = sphi 0, %s87
    %s90 = sphi 0, %s89
    %s104 = sphi 0, %s90
    %s108 = sphi 0, %s108
    %s110 = sphi 0, %s108
    %s111 = sphi 0, %s110
    %s125 = sphi 0, %s111
    %s129 = sphi 0, %s129
    %s131 = sphi 0, %s129
    %s132 = sphi 0, %s131
    %s146 = sphi 0, %s132
    %s154 = sphi 0, %s156
    %s157 = sphi 0, %s154
    %s158 = sphi 0, %s157
    %s174 = sphi 0, %s158
  $region4: #{complex_linear_projection.1} parent=0 // loop_header_branch
    %14 = sbr.rel (%p12) target = $region8
  $region5: #{complex_linear_projection.1} parent=0 // loop_body
    %s16 = ssub.s32 %s11, 1
    %s17 = ssub.s32 %s11, 2
    %s24 = sadd.s32 1, %s19
    %p25 = scmp.ge.s32.totalorder %s24, 1
    %s26 = scalar_select %p25, 0, %s24
    %s27 = sadd.s32 1, %s18
    %s28 = scalar_select %p25, %s27, %s18
    %p29 = scmp.ge.s32.totalorder %s28, 2
    %s30 = scalar_select %p29, 0, %s28
    %s31 = ssub.s32 %s18, %s30
    %s32 = ssub.s32 %s19, %s26
    %s33 = sor.u32 %s31, %s32
    %p34 = scmp.eq.s32.totalorder %s33, 0
    %s36 = sadd.s32 %s35, 1
    %s37 = scalar_select %p34, %s35, %s36
    %p40 = pneg %p34
    %p41 = scmp.eq.s32.totalorder %s11, 1
    %p42 = por %p40, %p41
    %p43 = scmp.ne.s32.totalorder %s35, %s38
    %p44 = scmp.eq.s32.totalorder %s11, 0
    %p45 = por %p43, %p44
    %p46 = scmp.ne.s32.totalorder %s35, %s38
    %p47 = scmp.eq.s32.totalorder %s16, 1
    %p48 = por %p46, %p47
    %p49 = scmp.ne.s32.totalorder %s38, %s39
    %p50 = scmp.eq.s32.totalorder %s16, 0
    %p51 = por %p49, %p50
    %p52 = scmp.ne.s32.totalorder %s38, %s39
    %p53 = scmp.eq.s32.totalorder %s17, 1
    %p54 = por %p52, %p53
    %p56 = scmp.ne.s32.totalorder %s39, %s55
    %p57 = scmp.eq.s32.totalorder %s17, 0
    %p58 = por %p56, %p57
    %s59 = ssub.s32 %s18, %s30
    %s60 = ssub.s32 %s19, %s26
    %s61 = sor.u32 %s59, %s60
    %p62 = scmp.eq.s32.totalorder %s61, 0
    %s64 = sadd.s32 %s63, 1
    %s65 = scalar_select %p62, %s63, %s64
    %p68 = pneg %p62
    %p69 = scmp.eq.s32.totalorder %s11, 1
    %p70 = por %p68, %p69
    %p71 = scmp.ne.s32.totalorder %s63, %s66
    %p72 = scmp.eq.s32.totalorder %s11, 0
    %p73 = por %p71, %p72
    %p74 = scmp.ne.s32.totalorder %s63, %s66
    %p75 = scmp.eq.s32.totalorder %s16, 1
    %p76 = por %p74, %p75
    %p77 = scmp.ne.s32.totalorder %s66, %s67
    %p78 = scmp.eq.s32.totalorder %s16, 0
    %p79 = por %p77, %p78
    %p80 = scmp.ne.s32.totalorder %s66, %s67
    %p81 = scmp.eq.s32.totalorder %s17, 1
    %p82 = por %p80, %p81
    %p84 = scmp.ne.s32.totalorder %s67, %s83
    %p85 = scmp.eq.s32.totalorder %s17, 0
    %p86 = por %p84, %p85
    %s88 = sadd.s32 %s87, 1
    %p91 = scmp.eq.s32.totalorder %s11, 1
    %p92 = scmp.ne.s32.totalorder %s87, %s89
    %p93 = scmp.eq.s32.totalorder %s11, 0
    %p94 = por %p92, %p93
    %p95 = scmp.ne.s32.totalorder %s87, %s89
    %p96 = scmp.eq.s32.totalorder %s16, 1
    %p97 = por %p95, %p96
    %p98 = scmp.ne.s32.totalorder %s89, %s90
    %p99 = scmp.eq.s32.totalorder %s16, 0
    %p100 = por %p98, %p99
    %p101 = scmp.ne.s32.totalorder %s89, %s90
    %p102 = scmp.eq.s32.totalorder %s17, 1
    %p103 = por %p101, %p102
    %p105 = scmp.ne.s32.totalorder %s90, %s104
    %p106 = scmp.eq.s32.totalorder %s17, 0
    %p107 = por %p105, %p106
    %s109 = sadd.s32 %s108, 1
    %p112 = scmp.eq.s32.totalorder %s11, 1
    %p113 = scmp.ne.s32.totalorder %s108, %s110
    %p114 = scmp.eq.s32.totalorder %s11, 0
    %p115 = por %p113, %p114
    %p116 = scmp.ne.s32.totalorder %s108, %s110
    %p117 = scmp.eq.s32.totalorder %s16, 1
    %p118 = por %p116, %p117
    %p119 = scmp.ne.s32.totalorder %s110, %s111
    %p120 = scmp.eq.s32.totalorder %s16, 0
    %p121 = por %p119, %p120
    %p122 = scmp.ne.s32.totalorder %s110, %s111
    %p123 = scmp.eq.s32.totalorder %s17, 1
    %p124 = por %p122, %p123
    %p126 = scmp.ne.s32.totalorder %s111, %s125
    %p127 = scmp.eq.s32.totalorder %s17, 0
    %p128 = por %p126, %p127
    %s130 = sadd.s32 %s129, 1
    %p133 = scmp.eq.s32.totalorder %s11, 1
    %p134 = scmp.ne.s32.totalorder %s129, %s131
    %p135 = scmp.eq.s32.totalorder %s11, 0
    %p136 = por %p134, %p135
    %p137 = scmp.ne.s32.totalorder %s129, %s131
    %p138 = scmp.eq.s32.totalorder %s16, 1
    %p139 = por %p137, %p138
    %p140 = scmp.ne.s32.totalorder %s131, %s132
    %p141 = scmp.eq.s32.totalorder %s16, 0
    %p142 = por %p140, %p141
    %p143 = scmp.ne.s32.totalorder %s131, %s132
    %p144 = scmp.eq.s32.totalorder %s17, 1
    %p145 = por %p143, %p144
    %p147 = scmp.ne.s32.totalorder %s132, %s146
    %p148 = scmp.eq.s32.totalorder %s17, 0
    %p149 = por %p147, %p148
    %s150 = ssub.s32 %s18, %s30
    %s151 = ssub.s32 %s19, %s26
    %s152 = sor.u32 %s150, %s151
    %p153 = scmp.eq.s32.totalorder %s152, 0
    %s155 = sadd.s32 %s154, 1
    %s156 = scalar_select %p153, %s154, %s155
    %p159 = pneg %p153
    %p160 = scmp.eq.s32.totalorder %s11, 1
    %p161 = por %p159, %p160
    %p162 = scmp.ne.s32.totalorder %s154, %s157
    %p163 = scmp.eq.s32.totalorder %s11, 0
    %p164 = por %p162, %p163
    %p165 = scmp.ne.s32.totalorder %s154, %s157
    %p166 = scmp.eq.s32.totalorder %s16, 1
    %p167 = por %p165, %p166
    %p168 = scmp.ne.s32.totalorder %s157, %s158
    %p169 = scmp.eq.s32.totalorder %s16, 0
    %p170 = por %p168, %p169
    %p171 = scmp.ne.s32.totalorder %s157, %s158
    %p172 = scmp.eq.s32.totalorder %s17, 1
    %p173 = por %p171, %p172
    %p175 = scmp.ne.s32.totalorder %s158, %s174
    %p176 = scmp.eq.s32.totalorder %s17, 0
    %p177 = por %p175, %p176
    %p178 = scmp.le.s32.totalorder 1, %s11
    %p179 = scmp.lt.s32.totalorder %s11, 3
    %p180 = pnand %p178, %p179
    %p181 = pneg %p180
    // Predicated region
    $region9: #{complex_linear_projection.1} parent=5 // pred_check
      _
    $region10: #{complex_linear_projection.1} parent=5 // pred_check_branch
      %183 = sbr.rel (%p180) target = $region12
    $region11: #{complex_linear_projection.1} parent=5 // pred_region
      %s184 = ssub.s32 %s11, 1
      // Predicated region
      $region13: #{complex_linear_projection.1} parent=11 // pred_check
        %p185 = pneg %p100
      $region14: #{complex_linear_projection.1} parent=11 // pred_check_branch
        %187 = sbr.rel (%p185) target = $region16
      $region15: #{complex_linear_projection.1} parent=11 // pred_region
        _
      $region16: #{complex_linear_projection.1} parent=11 // pred_fallthru
        _
      // Predicated region
      $region17: #{complex_linear_projection.1} parent=11 // pred_check
        %p188 = pneg %p121
      $region18: #{complex_linear_projection.1} parent=11 // pred_check_branch
        %190 = sbr.rel (%p188) target = $region20
      $region19: #{complex_linear_projection.1} parent=11 // pred_region
        _
      $region20: #{complex_linear_projection.1} parent=11 // pred_fallthru
        _
      // Predicated region
      $region21: #{complex_linear_projection.1} parent=11 // pred_check
        %p191 = pneg %p142
      $region22: #{complex_linear_projection.1} parent=11 // pred_check_branch
        %193 = sbr.rel (%p191) target = $region24
      $region23: #{complex_linear_projection.1} parent=11 // pred_region
        _
      $region24: #{complex_linear_projection.1} parent=11 // pred_fallthru
        _
    $region12: #{complex_linear_projection.1} parent=5 // pred_fallthru
      _
    %p194 = scmp.lt.s32.totalorder %s11, 2
    // Predicated region
    $region25: #{complex_linear_projection.1} parent=5 // pred_check
      %p195 = pneg %p194
    $region26: #{complex_linear_projection.1} parent=5 // pred_check_branch
      %197 = sbr.rel (%p195) target = $region28
    $region27: #{complex_linear_projection.1} parent=5 // pred_region
      // Predicated region
      $region29: #{complex_linear_projection.1} parent=27 // pred_check
        %p198 = pneg %p45
      $region30: #{complex_linear_projection.1} parent=27 // pred_check_branch
        %200 = sbr.rel (%p198) target = $region32
      $region31: #{complex_linear_projection.1} parent=27 // pred_region
        %p201 = scmp.lt.s32.totalorder %s18, 1
        %s202 = scalar_select %p201, %s18, 1
        %p203 = scmp.lt.s32.totalorder %s19, 0
        %s204 = scalar_select %p203, %s19, 0
        %s205 = sadd.s32 %s204, %s202
        %s206 = smul.addr %s205, 4
        %s207 = scalar_lea.vmem %s0, %s206
      $region32: #{complex_linear_projection.1} parent=27 // pred_fallthru
        _
      // Predicated region
      $region33: #{complex_linear_projection.1} parent=27 // pred_check
        %p208 = pneg %p73
      $region34: #{complex_linear_projection.1} parent=27 // pred_check_branch
        %210 = sbr.rel (%p208) target = $region36
      $region35: #{complex_linear_projection.1} parent=27 // pred_region
        %p211 = scmp.lt.s32.totalorder %s18, 1
        %s212 = scalar_select %p211, %s18, 1
        %p213 = scmp.lt.s32.totalorder %s19, 0
        %s214 = scalar_select %p213, %s19, 0
        %s215 = sadd.s32 %s214, %s212
        %s216 = smul.addr %s215, 4
        %s217 = scalar_lea.vmem %s1, %s216
      $region36: #{complex_linear_projection.1} parent=27 // pred_fallthru
        _
    $region28: #{complex_linear_projection.1} parent=5 // pred_fallthru
      _
    %p218 = scmp.le.s32.totalorder 1, %s11
    %p219 = scmp.lt.s32.totalorder %s11, 3
    %p220 = pnand %p218, %p219
    %p221 = pneg %p220
    // Predicated region
    $region37: #{complex_linear_projection.1} parent=5 // pred_check
      _
    $region38: #{complex_linear_projection.1} parent=5 // pred_check_branch
      %223 = sbr.rel (%p220) target = $region40
    $region39: #{complex_linear_projection.1} parent=5 // pred_region
      %s224 = ssub.s32 %s11, 1
      %p225 = scmp.lt.s32.totalorder %s20, 1
      %s226 = scalar_select %p225, %s20, 1
      %p227 = scmp.lt.s32.totalorder %s21, 0
      %s228 = scalar_select %p227, %s21, 0
      %s229 = sadd.s32 %s228, %s226
      %s230 = smul.addr %s229, 4
      %s231 = scalar_lea.vmem %s0, %s230
      %p232 = pneg %p51
      %p233 = pneg %p48
      %p234 = scmp.lt.s32.totalorder %s20, 1
      %s235 = scalar_select %p234, %s20, 1
      %p236 = scmp.lt.s32.totalorder %s21, 0
      %s237 = scalar_select %p236, %s21, 0
      %s238 = sadd.s32 %s237, %s235
      %s239 = smul.addr %s238, 4
      %s240 = scalar_lea.vmem %s1, %s239
      %p241 = pneg %p79
      %p242 = pneg %p76
      %p243 = pneg %p100
      %p244 = pneg %p97
      %p245 = pneg %p121
      %p246 = pneg %p118
      %p247 = pneg %p142
      %p248 = pneg %p139
      %p249 = pneg %p170
      %p250 = pneg %p167
      %p251 = scmp.lt.s32.totalorder %s20, 1
      %s252 = scalar_select %p251, %s20, 1
      %p253 = scmp.lt.s32.totalorder %s21, 0
      %s254 = scalar_select %p253, %s21, 0
      %s255 = sadd.s32 %s254, %s252
      %s256 = smul.addr %s255, 4
      %s257 = scalar_lea.vmem %s5, %s256
      %p258 = scmp.lt.s32.totalorder %s20, 1
      %s259 = scalar_select %p258, %s20, 1
      %p260 = scmp.lt.s32.totalorder %s21, 0
      %s261 = scalar_select %p260, %s21, 0
      %s262 = sadd.s32 %s261, %s259
      %s263 = smul.addr %s262, 4
      %s264 = scalar_lea.vmem %s0, %s263
      %p265 = scmp.lt.s32.totalorder %s20, 1
      %s266 = scalar_select %p265, %s20, 1
      %p267 = scmp.lt.s32.totalorder %s21, 0
      %s268 = scalar_select %p267, %s21, 0
      %s269 = sadd.s32 %s268, %s266
      %s270 = smul.addr %s269, 4
      %s271 = scalar_lea.vmem %s1, %s270
      %p272 = scmp.lt.s32.totalorder %s20, 1
      %s273 = scalar_select %p272, %s20, 1
      %p274 = scmp.lt.s32.totalorder %s21, 0
      %s275 = scalar_select %p274, %s21, 0
      %s276 = sadd.s32 %s275, %s273
      %s277 = smul.addr %s276, 4
      %s278 = scalar_lea.vmem %s5, %s277
      %v279 = vld [vmem:[%s2] sm:$0xff]
      %v280 = vld [vmem:[%s264] sm:$0xf]
      %v281 = vld [vmem:[%s3] sm:$0xff]
      %v282 = vld [vmem:[%s271] sm:$0xf]
      %vm283 = vcmask 31744
      %v285 = vsel %vm283, %v281, 0
      %vm287 = vcmask 1043456
      %v289 = vsel %vm287, %v282, 0
      %291 = vmatprep.subr.mxu0 0.0
      %v292 = vand.u32 %v289, 4294901760
      %293 = vmatpush1.msra.mxu0 %v292
      %294 = vmatprep.subr.mxu0 0.0
      %295 = vmatpush1.msra.mxu0 0.0
      %296 = vmatprep.subr.mxu0 0.0
      %297 = vmatpush1.msra.mxu0 0.0
      %298 = vmatprep.subr.mxu0 0.0
      %299 = vmatpush1.msra.mxu0 0.0
      %300 = vmatprep.subr.mxu0 0.0
      %301 = vmatpush1.msra.mxu0 0.0
      %302 = vmatprep.subr.mxu0 0.0
      %303 = vmatpush1.msra.mxu0 0.0
      %304 = vmatprep.subr.mxu0 0.0
      %305 = vmatpush1.msra.mxu0 0.0
      %306 = vmatprep.subr.mxu0 0.0
      %307 = vmatpush1.msra.mxu0 0.0
      %308 = vmatprep.subr.mxu0 0.0
      %309 = vmatpush1.msra.mxu0 0.0
      %310 = vmatprep.subr.mxu0 0.0
      %311 = vmatpush1.msra.mxu0 0.0
      %312 = vmatprep.subr.mxu0 0.0
      %313 = vmatpush1.msra.mxu0 0.0
      %314 = vmatprep.subr.mxu0 0.0
      %315 = vmatpush1.msra.mxu0 0.0
      %316 = vmatprep.subr.mxu0 0.0
      %317 = vmatpush1.msra.mxu0 0.0
      %318 = vmatprep.subr.mxu0 0.0
      %319 = vmatpush1.msra.mxu0 0.0
      %320 = vmatprep.subr.mxu0 0.0
      %321 = vmatpush1.msra.mxu0 0.0
      %322 = vmatprep.subr.mxu0 0.0
      %323 = vmatpush1.msra.mxu0 0.0
      %324 = vmatprep.subr.mxu0 0.0
      %325 = vmatpush1.msra.mxu0 0.0
      %326 = vmatprep.subr.mxu0 0.0
      %327 = vmatpush1.msra.mxu0 0.0
      %328 = vmatprep.subr.mxu0 0.0
      %329 = vmatpush1.msra.mxu0 0.0
      %330 = vmatprep.subr.mxu0 0.0
      %331 = vmatpush1.msra.mxu0 0.0
      %332 = vmatprep.subr.mxu0 0.0
      %333 = vmatpush1.msra.mxu0 0.0
      %334 = vmatprep.subr.mxu0 0.0
      %335 = vmatpush1.msra.mxu0 0.0
      %336 = vmatprep.subr.mxu0 0.0
      %337 = vmatpush1.msra.mxu0 0.0
      %338 = vmatprep.subr.mxu0 0.0
      %339 = vmatpush1.msra.mxu0 0.0
      %340 = vmatprep.subr.mxu0 0.0
      %341 = vmatpush1.msra.mxu0 0.0
      %342 = vmatprep.subr.mxu0 0.0
      %343 = vmatpush1.msra.mxu0 0.0
      %344 = vmatprep.subr.mxu0 0.0
      %345 = vmatpush1.msra.mxu0 0.0
      %346 = vmatprep.subr.mxu0 0.0
      %347 = vmatpush1.msra.mxu0 0.0
      %348 = vmatprep.subr.mxu0 0.0
      %349 = vmatpush1.msra.mxu0 0.0
      %350 = vmatprep.subr.mxu0 0.0
      %351 = vmatpush1.msra.mxu0 0.0
      %352 = vmatprep.subr.mxu0 0.0
      %353 = vmatpush1.msra.mxu0 0.0
      %354 = vmatprep.subr.mxu0 0.0
      %355 = vmatpush1.msra.mxu0 0.0
      %356 = vmatprep.mubr.f32.mxu0 0.0
      %v357 = vand.u32 %v285, 4294901760
      %v358 = vsub.f32 %v285, %v357
      %v359 = vand.u32 %v358, 4294901760
      %v360 = vsub.f32 %v358, %v359
      %v361 = vand.u32 %v360, 4294901760
      %362 = vmatmul.mubr.f32.gmra.mrb[0].mxu0 %v361
      %v363 = vpop.f32.mrb[0].mxu0
      %v364 = vadd.f32 0.0, %v363
      %v365 = vpop.f32.mrb[0].mxu0
      %366 = vdwg.mxu0
      %367 = vmatprep.subr.mxu0 0.0
      %v368 = vand.u32 %v289, 4294901760
      %v369 = vsub.f32 %v289, %v368
      %v370 = vand.u32 %v369, 4294901760
      %v371 = vsub.f32 %v369, %v370
      %v372 = vand.u32 %v371, 4294901760
      %373 = vmatpush1.msra.mxu0 %v372
      %374 = vmatprep.subr.mxu0 0.0
      %375 = vmatpush1.msra.mxu0 0.0
      %376 = vmatprep.subr.mxu0 0.0
      %377 = vmatpush1.msra.mxu0 0.0
      %378 = vmatprep.subr.mxu0 0.0
      %379 = vmatpush1.msra.mxu0 0.0
      %380 = vmatprep.subr.mxu0 0.0
      %381 = vmatpush1.msra.mxu0 0.0
      %382 = vmatprep.subr.mxu0 0.0
      %383 = vmatpush1.msra.mxu0 0.0
      %384 = vmatprep.subr.mxu0 0.0
      %385 = vmatpush1.msra.mxu0 0.0
      %386 = vmatprep.subr.mxu0 0.0
      %387 = vmatpush1.msra.mxu0 0.0
      %388 = vmatprep.subr.mxu0 0.0
      %389 = vmatpush1.msra.mxu0 0.0
      %390 = vmatprep.subr.mxu0 0.0
      %391 = vmatpush1.msra.mxu0 0.0
      %392 = vmatprep.subr.mxu0 0.0
      %393 = vmatpush1.msra.mxu0 0.0
      %394 = vmatprep.subr.mxu0 0.0
      %395 = vmatpush1.msra.mxu0 0.0
      %396 = vmatprep.subr.mxu0 0.0
      %397 = vmatpush1.msra.mxu0 0.0
      %398 = vmatprep.subr.mxu0 0.0
      %399 = vmatpush1.msra.mxu0 0.0
      %400 = vmatprep.subr.mxu0 0.0
      %401 = vmatpush1.msra.mxu0 0.0
      %402 = vmatprep.subr.mxu0 0.0
      %403 = vmatpush1.msra.mxu0 0.0
      %404 = vmatprep.subr.mxu0 0.0
      %405 = vmatpush1.msra.mxu0 0.0
      %406 = vmatprep.subr.mxu0 0.0
      %407 = vmatpush1.msra.mxu0 0.0
      %408 = vmatprep.subr.mxu0 0.0
      %409 = vmatpush1.msra.mxu0 0.0
      %410 = vmatprep.subr.mxu0 0.0
      %411 = vmatpush1.msra.mxu0 0.0
      %412 = vmatprep.subr.mxu0 0.0
      %413 = vmatpush1.msra.mxu0 0.0
      %414 = vmatprep.subr.mxu0 0.0
      %415 = vmatpush1.msra.mxu0 0.0
      %416 = vmatprep.subr.mxu0 0.0
      %417 = vmatpush1.msra.mxu0 0.0
      %418 = vmatprep.subr.mxu0 0.0
      %419 = vmatpush1.msra.mxu0 0.0
      %420 = vmatprep.subr.mxu0 0.0
      %421 = vmatpush1.msra.mxu0 0.0
      %422 = vmatprep.subr.mxu0 0.0
      %423 = vmatpush1.msra.mxu0 0.0
      %424 = vmatprep.subr.mxu0 0.0
      %425 = vmatpush1.msra.mxu0 0.0
      %426 = vmatprep.subr.mxu0 0.0
      %427 = vmatpush1.msra.mxu0 0.0
      %428 = vmatprep.subr.mxu0 0.0
      %429 = vmatpush1.msra.mxu0 0.0
      %430 = vmatprep.subr.mxu0 0.0
      %431 = vmatpush1.msra.mxu0 0.0
      %432 = vmatprep.subr.mxu0 0.0
      %433 = vmatpush1.msra.mxu0 0.0
      %434 = vmatprep.subr.mxu0 0.0
      %435 = vmatpush1.msra.mxu0 0.0
      %436 = vmatprep.mubr.f32.mxu0 0.0
      %v437 = vand.u32 %v285, 4294901760
      %438 = vmatmul.mubr.f32.gmra.mrb[0].mxu0 %v437
      %v439 = vpop.f32.mrb[0].mxu0
      %v440 = vadd.f32 %v364, %v439
      %v441 = vpop.f32.mrb[0].mxu0
      %442 = vdwg.mxu0
      %443 = vmatprep.subr.mxu0 0.0
      %v444 = vand.u32 %v289, 4294901760
      %v445 = vsub.f32 %v289, %v444
      %446 = vmatpush1.msra.mxu0 %v445
      %447 = vmatprep.subr.mxu0 0.0
      %448 = vmatpush1.msra.mxu0 0.0
      %449 = vmatprep.subr.mxu0 0.0
      %450 = vmatpush1.msra.mxu0 0.0
      %451 = vmatprep.subr.mxu0 0.0
      %452 = vmatpush1.msra.mxu0 0.0
      %453 = vmatprep.subr.mxu0 0.0
      %454 = vmatpush1.msra.mxu0 0.0
      %455 = vmatprep.subr.mxu0 0.0
      %456 = vmatpush1.msra.mxu0 0.0
      %457 = vmatprep.subr.mxu0 0.0
      %458 = vmatpush1.msra.mxu0 0.0
      %459 = vmatprep.subr.mxu0 0.0
      %460 = vmatpush1.msra.mxu0 0.0
      %461 = vmatprep.subr.mxu0 0.0
      %462 = vmatpush1.msra.mxu0 0.0
      %463 = vmatprep.subr.mxu0 0.0
      %464 = vmatpush1.msra.mxu0 0.0
      %465 = vmatprep.subr.mxu0 0.0
      %466 = vmatpush1.msra.mxu0 0.0
      %467 = vmatprep.subr.mxu0 0.0
      %468 = vmatpush1.msra.mxu0 0.0
      %469 = vmatprep.subr.mxu0 0.0
      %470 = vmatpush1.msra.mxu0 0.0
      %471 = vmatprep.subr.mxu0 0.0
      %472 = vmatpush1.msra.mxu0 0.0
      %473 = vmatprep.subr.mxu0 0.0
      %474 = vmatpush1.msra.mxu0 0.0
      %475 = vmatprep.subr.mxu0 0.0
      %476 = vmatpush1.msra.mxu0 0.0
      %477 = vmatprep.subr.mxu0 0.0
      %478 = vmatpush1.msra.mxu0 0.0
      %479 = vmatprep.subr.mxu0 0.0
      %480 = vmatpush1.msra.mxu0 0.0
      %481 = vmatprep.subr.mxu0 0.0
      %482 = vmatpush1.msra.mxu0 0.0
      %483 = vmatprep.subr.mxu0 0.0
      %484 = vmatpush1.msra.mxu0 0.0
      %485 = vmatprep.subr.mxu0 0.0
      %486 = vmatpush1.msra.mxu0 0.0
      %487 = vmatprep.subr.mxu0 0.0
      %488 = vmatpush1.msra.mxu0 0.0
      %489 = vmatprep.subr.mxu0 0.0
      %490 = vmatpush1.msra.mxu0 0.0
      %491 = vmatprep.subr.mxu0 0.0
      %492 = vmatpush1.msra.mxu0 0.0
      %493 = vmatprep.subr.mxu0 0.0
      %494 = vmatpush1.msra.mxu0 0.0
      %495 = vmatprep.subr.mxu0 0.0
      %496 = vmatpush1.msra.mxu0 0.0
      %497 = vmatprep.subr.mxu0 0.0
      %498 = vmatpush1.msra.mxu0 0.0
      %499 = vmatprep.subr.mxu0 0.0
      %500 = vmatpush1.msra.mxu0 0.0
      %501 = vmatprep.subr.mxu0 0.0
      %502 = vmatpush1.msra.mxu0 0.0
      %503 = vmatprep.subr.mxu0 0.0
      %504 = vmatpush1.msra.mxu0 0.0
      %505 = vmatprep.subr.mxu0 0.0
      %506 = vmatpush1.msra.mxu0 0.0
      %507 = vmatprep.subr.mxu0 0.0
      %508 = vmatpush1.msra.mxu0 0.0
      %509 = vmatprep.mubr.f32.mxu0 0.0
      %v510 = vand.u32 %v285, 4294901760
      %v511 = vsub.f32 %v285, %v510
      %512 = vmatmul.mubr.f32.gmra.mrb[0].mxu0 %v511
      %v513 = vpop.f32.mrb[0].mxu0
      %v514 = vadd.f32 %v440, %v513
      %v515 = vpop.f32.mrb[0].mxu0
      %516 = vdwg.mxu0
      %517 = vmatprep.subr.mxu0 0.0
      %v518 = vand.u32 %v289, 4294901760
      %519 = vmatpush1.msra.mxu0 %v518
      %520 = vmatprep.subr.mxu0 0.0
      %521 = vmatpush1.msra.mxu0 0.0
      %522 = vmatprep.subr.mxu0 0.0
      %523 = vmatpush1.msra.mxu0 0.0
      %524 = vmatprep.subr.mxu0 0.0
      %525 = vmatpush1.msra.mxu0 0.0
      %526 = vmatprep.subr.mxu0 0.0
      %527 = vmatpush1.msra.mxu0 0.0
      %528 = vmatprep.subr.mxu0 0.0
      %529 = vmatpush1.msra.mxu0 0.0
      %530 = vmatprep.subr.mxu0 0.0
      %531 = vmatpush1.msra.mxu0 0.0
      %532 = vmatprep.subr.mxu0 0.0
      %533 = vmatpush1.msra.mxu0 0.0
      %534 = vmatprep.subr.mxu0 0.0
      %535 = vmatpush1.msra.mxu0 0.0
      %536 = vmatprep.subr.mxu0 0.0
      %537 = vmatpush1.msra.mxu0 0.0
      %538 = vmatprep.subr.mxu0 0.0
      %539 = vmatpush1.msra.mxu0 0.0
      %540 = vmatprep.subr.mxu0 0.0
      %541 = vmatpush1.msra.mxu0 0.0
      %542 = vmatprep.subr.mxu0 0.0
      %543 = vmatpush1.msra.mxu0 0.0
      %544 = vmatprep.subr.mxu0 0.0
      %545 = vmatpush1.msra.mxu0 0.0
      %546 = vmatprep.subr.mxu0 0.0
      %547 = vmatpush1.msra.mxu0 0.0
      %548 = vmatprep.subr.mxu0 0.0
      %549 = vmatpush1.msra.mxu0 0.0
      %550 = vmatprep.subr.mxu0 0.0
      %551 = vmatpush1.msra.mxu0 0.0
      %552 = vmatprep.subr.mxu0 0.0
      %553 = vmatpush1.msra.mxu0 0.0
      %554 = vmatprep.subr.mxu0 0.0
      %555 = vmatpush1.msra.mxu0 0.0
      %556 = vmatprep.subr.mxu0 0.0
      %557 = vmatpush1.msra.mxu0 0.0
      %558 = vmatprep.subr.mxu0 0.0
      %559 = vmatpush1.msra.mxu0 0.0
      %560 = vmatprep.subr.mxu0 0.0
      %561 = vmatpush1.msra.mxu0 0.0
      %562 = vmatprep.subr.mxu0 0.0
      %563 = vmatpush1.msra.mxu0 0.0
      %564 = vmatprep.subr.mxu0 0.0
      %565 = vmatpush1.msra.mxu0 0.0
      %566 = vmatprep.subr.mxu0 0.0
      %567 = vmatpush1.msra.mxu0 0.0
      %568 = vmatprep.subr.mxu0 0.0
      %569 = vmatpush1.msra.mxu0 0.0
      %570 = vmatprep.subr.mxu0 0.0
      %571 = vmatpush1.msra.mxu0 0.0
      %572 = vmatprep.subr.mxu0 0.0
      %573 = vmatpush1.msra.mxu0 0.0
      %574 = vmatprep.subr.mxu0 0.0
      %575 = vmatpush1.msra.mxu0 0.0
      %576 = vmatprep.subr.mxu0 0.0
      %577 = vmatpush1.msra.mxu0 0.0
      %578 = vmatprep.subr.mxu0 0.0
      %579 = vmatpush1.msra.mxu0 0.0
      %580 = vmatprep.subr.mxu0 0.0
      %581 = vmatpush1.msra.mxu0 0.0
      %582 = vmatprep.mubr.f32.mxu0 0.0
      %v583 = vand.u32 %v285, 4294901760
      %v584 = vsub.f32 %v285, %v583
      %v585 = vand.u32 %v584, 4294901760
      %586 = vmatmul.mubr.f32.gmra.mrb[0].mxu0 %v585
      %v587 = vpop.f32.mrb[0].mxu0
      %v588 = vadd.f32 %v514, %v587
      %v589 = vpop.f32.mrb[0].mxu0
      %590 = vdwg.mxu0
      %591 = vmatprep.subr.mxu0 0.0
      %v592 = vand.u32 %v289, 4294901760
      %v593 = vsub.f32 %v289, %v592
      %v594 = vand.u32 %v593, 4294901760
      %595 = vmatpush1.msra.mxu0 %v594
      %596 = vmatprep.subr.mxu0 0.0
      %597 = vmatpush1.msra.mxu0 0.0
      %598 = vmatprep.subr.mxu0 0.0
      %599 = vmatpush1.msra.mxu0 0.0
      %600 = vmatprep.subr.mxu0 0.0
      %601 = vmatpush1.msra.mxu0 0.0
      %602 = vmatprep.subr.mxu0 0.0
      %603 = vmatpush1.msra.mxu0 0.0
      %604 = vmatprep.subr.mxu0 0.0
      %605 = vmatpush1.msra.mxu0 0.0
      %606 = vmatprep.subr.mxu0 0.0
      %607 = vmatpush1.msra.mxu0 0.0
      %608 = vmatprep.subr.mxu0 0.0
      %609 = vmatpush1.msra.mxu0 0.0
      %610 = vmatprep.subr.mxu0 0.0
      %611 = vmatpush1.msra.mxu0 0.0
      %612 = vmatprep.subr.mxu0 0.0
      %613 = vmatpush1.msra.mxu0 0.0
      %614 = vmatprep.subr.mxu0 0.0
      %615 = vmatpush1.msra.mxu0 0.0
      %616 = vmatprep.subr.mxu0 0.0
      %617 = vmatpush1.msra.mxu0 0.0
      %618 = vmatprep.subr.mxu0 0.0
      %619 = vmatpush1.msra.mxu0 0.0
      %620 = vmatprep.subr.mxu0 0.0
      %621 = vmatpush1.msra.mxu0 0.0
      %622 = vmatprep.subr.mxu0 0.0
      %623 = vmatpush1.msra.mxu0 0.0
      %624 = vmatprep.subr.mxu0 0.0
      %625 = vmatpush1.msra.mxu0 0.0
      %626 = vmatprep.subr.mxu0 0.0
      %627 = vmatpush1.msra.mxu0 0.0
      %628 = vmatprep.subr.mxu0 0.0
      %629 = vmatpush1.msra.mxu0 0.0
      %630 = vmatprep.subr.mxu0 0.0
      %631 = vmatpush1.msra.mxu0 0.0
      %632 = vmatprep.subr.mxu0 0.0
      %633 = vmatpush1.msra.mxu0 0.0
      %634 = vmatprep.subr.mxu0 0.0
      %635 = vmatpush1.msra.mxu0 0.0
      %636 = vmatprep.subr.mxu0 0.0
      %637 = vmatpush1.msra.mxu0 0.0
      %638 = vmatprep.subr.mxu0 0.0
      %639 = vmatpush1.msra.mxu0 0.0
      %640 = vmatprep.subr.mxu0 0.0
      %641 = vmatpush1.msra.mxu0 0.0
      %642 = vmatprep.subr.mxu0 0.0
      %643 = vmatpush1.msra.mxu0 0.0
      %644 = vmatprep.subr.mxu0 0.0
      %645 = vmatpush1.msra.mxu0 0.0
      %646 = vmatprep.subr.mxu0 0.0
      %647 = vmatpush1.msra.mxu0 0.0
      %648 = vmatprep.subr.mxu0 0.0
      %649 = vmatpush1.msra.mxu0 0.0
      %650 = vmatprep.subr.mxu0 0.0
      %651 = vmatpush1.msra.mxu0 0.0
      %652 = vmatprep.subr.mxu0 0.0
      %653 = vmatpush1.msra.mxu0 0.0
      %654 = vmatprep.subr.mxu0 0.0
      %655 = vmatpush1.msra.mxu0 0.0
      %656 = vmatprep.subr.mxu0 0.0
      %657 = vmatpush1.msra.mxu0 0.0
      %658 = vmatprep.mubr.f32.mxu0 0.0
      %v659 = vand.u32 %v285, 4294901760
      %660 = vmatmul.mubr.f32.gmra.mrb[0].mxu0 %v659
      %v661 = vpop.f32.mrb[0].mxu0
      %v662 = vadd.f32 %v588, %v661
      %v663 = vpop.f32.mrb[0].mxu0
      %664 = vdwg.mxu0
      %665 = vmatprep.subr.mxu0 0.0
      %v666 = vand.u32 %v289, 4294901760
      %667 = vmatpush1.msra.mxu0 %v666
      %668 = vmatprep.subr.mxu0 0.0
      %669 = vmatpush1.msra.mxu0 0.0
      %670 = vmatprep.subr.mxu0 0.0
      %671 = vmatpush1.msra.mxu0 0.0
      %672 = vmatprep.subr.mxu0 0.0
      %673 = vmatpush1.msra.mxu0 0.0
      %674 = vmatprep.subr.mxu0 0.0
      %675 = vmatpush1.msra.mxu0 0.0
      %676 = vmatprep.subr.mxu0 0.0
      %677 = vmatpush1.msra.mxu0 0.0
      %678 = vmatprep.subr.mxu0 0.0
      %679 = vmatpush1.msra.mxu0 0.0
      %680 = vmatprep.subr.mxu0 0.0
      %681 = vmatpush1.msra.mxu0 0.0
      %682 = vmatprep.subr.mxu0 0.0
      %683 = vmatpush1.msra.mxu0 0.0
      %684 = vmatprep.subr.mxu0 0.0
      %685 = vmatpush1.msra.mxu0 0.0
      %686 = vmatprep.subr.mxu0 0.0
      %687 = vmatpush1.msra.mxu0 0.0
      %688 = vmatprep.subr.mxu0 0.0
      %689 = vmatpush1.msra.mxu0 0.0
      %690 = vmatprep.subr.mxu0 0.0
      %691 = vmatpush1.msra.mxu0 0.0
      %692 = vmatprep.subr.mxu0 0.0
      %693 = vmatpush1.msra.mxu0 0.0
      %694 = vmatprep.subr.mxu0 0.0
      %695 = vmatpush1.msra.mxu0 0.0
      %696 = vmatprep.subr.mxu0 0.0
      %697 = vmatpush1.msra.mxu0 0.0
      %698 = vmatprep.subr.mxu0 0.0
      %699 = vmatpush1.msra.mxu0 0.0
      %700 = vmatprep.subr.mxu0 0.0
      %701 = vmatpush1.msra.mxu0 0.0
      %702 = vmatprep.subr.mxu0 0.0
      %703 = vmatpush1.msra.mxu0 0.0
      %704 = vmatprep.subr.mxu0 0.0
      %705 = vmatpush1.msra.mxu0 0.0
      %706 = vmatprep.subr.mxu0 0.0
      %707 = vmatpush1.msra.mxu0 0.0
      %708 = vmatprep.subr.mxu0 0.0
      %709 = vmatpush1.msra.mxu0 0.0
      %710 = vmatprep.subr.mxu0 0.0
      %711 = vmatpush1.msra.mxu0 0.0
      %712 = vmatprep.subr.mxu0 0.0
      %713 = vmatpush1.msra.mxu0 0.0
      %714 = vmatprep.subr.mxu0 0.0
      %715 = vmatpush1.msra.mxu0 0.0
      %716 = vmatprep.subr.mxu0 0.0
      %717 = vmatpush1.msra.mxu0 0.0
      %718 = vmatprep.subr.mxu0 0.0
      %719 = vmatpush1.msra.mxu0 0.0
      %720 = vmatprep.subr.mxu0 0.0
      %721 = vmatpush1.msra.mxu0 0.0
      %722 = vmatprep.subr.mxu0 0.0
      %723 = vmatpush1.msra.mxu0 0.0
      %724 = vmatprep.subr.mxu0 0.0
      %725 = vmatpush1.msra.mxu0 0.0
      %726 = vmatprep.subr.mxu0 0.0
      %727 = vmatpush1.msra.mxu0 0.0
      %728 = vmatprep.subr.mxu0 0.0
      %729 = vmatpush1.msra.mxu0 0.0
      %730 = vmatprep.mubr.f32.mxu0 0.0
      %v731 = vand.u32 %v285, 4294901760
      %732 = vmatmul.mubr.f32.gmra.mrb[0].mxu0 %v731
      %v733 = vpop.f32.mrb[0].mxu0
      %v734 = vadd.f32 %v662, %v733
      %v735 = vpop.f32.mrb[0].mxu0
      %736 = vdwg.mxu0
      %v738 = vsel %vm283, %v279, 0
      %v741 = vsel %vm287, %v280, 0
      %743 = vmatprep.subr.mxu0 0.0
      %v744 = vand.u32 %v741, 4294901760
      %745 = vmatpush1.msra.mxu0 %v744
      %746 = vmatprep.subr.mxu0 0.0
      %747 = vmatpush1.msra.mxu0 0.0
      %748 = vmatprep.subr.mxu0 0.0
      %749 = vmatpush1.msra.mxu0 0.0
      %750 = vmatprep.subr.mxu0 0.0
      %751 = vmatpush1.msra.mxu0 0.0
      %752 = vmatprep.subr.mxu0 0.0
      %753 = vmatpush1.msra.mxu0 0.0
      %754 = vmatprep.subr.mxu0 0.0
      %755 = vmatpush1.msra.mxu0 0.0
      %756 = vmatprep.subr.mxu0 0.0
      %757 = vmatpush1.msra.mxu0 0.0
      %758 = vmatprep.subr.mxu0 0.0
      %759 = vmatpush1.msra.mxu0 0.0
      %760 = vmatprep.subr.mxu0 0.0
      %761 = vmatpush1.msra.mxu0 0.0
      %762 = vmatprep.subr.mxu0 0.0
      %763 = vmatpush1.msra.mxu0 0.0
      %764 = vmatprep.subr.mxu0 0.0
      %765 = vmatpush1.msra.mxu0 0.0
      %766 = vmatprep.subr.mxu0 0.0
      %767 = vmatpush1.msra.mxu0 0.0
      %768 = vmatprep.subr.mxu0 0.0
      %769 = vmatpush1.msra.mxu0 0.0
      %770 = vmatprep.subr.mxu0 0.0
      %771 = vmatpush1.msra.mxu0 0.0
      %772 = vmatprep.subr.mxu0 0.0
      %773 = vmatpush1.msra.mxu0 0.0
      %774 = vmatprep.subr.mxu0 0.0
      %775 = vmatpush1.msra.mxu0 0.0
      %776 = vmatprep.subr.mxu0 0.0
      %777 = vmatpush1.msra.mxu0 0.0
      %778 = vmatprep.subr.mxu0 0.0
      %779 = vmatpush1.msra.mxu0 0.0
      %780 = vmatprep.subr.mxu0 0.0
      %781 = vmatpush1.msra.mxu0 0.0
      %782 = vmatprep.subr.mxu0 0.0
      %783 = vmatpush1.msra.mxu0 0.0
      %784 = vmatprep.subr.mxu0 0.0
      %785 = vmatpush1.msra.mxu0 0.0
      %786 = vmatprep.subr.mxu0 0.0
      %787 = vmatpush1.msra.mxu0 0.0
      %788 = vmatprep.subr.mxu0 0.0
      %789 = vmatpush1.msra.mxu0 0.0
      %790 = vmatprep.subr.mxu0 0.0
      %791 = vmatpush1.msra.mxu0 0.0
      %792 = vmatprep.subr.mxu0 0.0
      %793 = vmatpush1.msra.mxu0 0.0
      %794 = vmatprep.subr.mxu0 0.0
      %795 = vmatpush1.msra.mxu0 0.0
      %796 = vmatprep.subr.mxu0 0.0
      %797 = vmatpush1.msra.mxu0 0.0
      %798 = vmatprep.subr.mxu0 0.0
      %799 = vmatpush1.msra.mxu0 0.0
      %800 = vmatprep.subr.mxu0 0.0
      %801 = vmatpush1.msra.mxu0 0.0
      %802 = vmatprep.subr.mxu0 0.0
      %803 = vmatpush1.msra.mxu0 0.0
      %804 = vmatprep.subr.mxu0 0.0
      %805 = vmatpush1.msra.mxu0 0.0
      %806 = vmatprep.subr.mxu0 0.0
      %807 = vmatpush1.msra.mxu0 0.0
      %808 = vmatprep.mubr.f32.mxu0 0.0
      %v809 = vand.u32 %v738, 4294901760
      %v810 = vsub.f32 %v738, %v809
      %v811 = vand.u32 %v810, 4294901760
      %v812 = vsub.f32 %v810, %v811
      %v813 = vand.u32 %v812, 4294901760
      %814 = vmatmul.mubr.f32.gmra.mrb[0].mxu0 %v813
      %v815 = vpop.f32.mrb[0].mxu0
      %v816 = vadd.f32 %v734, %v815
      %v817 = vpop.f32.mrb[0].mxu0
      %818 = vdwg.mxu0
      %819 = vmatprep.subr.mxu0 0.0
      %v820 = vand.u32 %v741, 4294901760
      %v821 = vsub.f32 %v741, %v820
      %v822 = vand.u32 %v821, 4294901760
      %v823 = vsub.f32 %v821, %v822
      %v824 = vand.u32 %v823, 4294901760
      %825 = vmatpush1.msra.mxu0 %v824
      %826 = vmatprep.subr.mxu0 0.0
      %827 = vmatpush1.msra.mxu0 0.0
      %828 = vmatprep.subr.mxu0 0.0
      %829 = vmatpush1.msra.mxu0 0.0
      %830 = vmatprep.subr.mxu0 0.0
      %831 = vmatpush1.msra.mxu0 0.0
      %832 = vmatprep.subr.mxu0 0.0
      %833 = vmatpush1.msra.mxu0 0.0
      %834 = vmatprep.subr.mxu0 0.0
      %835 = vmatpush1.msra.mxu0 0.0
      %836 = vmatprep.subr.mxu0 0.0
      %837 = vmatpush1.msra.mxu0 0.0
      %838 = vmatprep.subr.mxu0 0.0
      %839 = vmatpush1.msra.mxu0 0.0
      %840 = vmatprep.subr.mxu0 0.0
      %841 = vmatpush1.msra.mxu0 0.0
      %842 = vmatprep.subr.mxu0 0.0
      %843 = vmatpush1.msra.mxu0 0.0
      %844 = vmatprep.subr.mxu0 0.0
      %845 = vmatpush1.msra.mxu0 0.0
      %846 = vmatprep.subr.mxu0 0.0
      %847 = vmatpush1.msra.mxu0 0.0
      %848 = vmatprep.subr.mxu0 0.0
      %849 = vmatpush1.msra.mxu0 0.0
      %850 = vmatprep.subr.mxu0 0.0
      %851 = vmatpush1.msra.mxu0 0.0
      %852 = vmatprep.subr.mxu0 0.0
      %853 = vmatpush1.msra.mxu0 0.0
      %854 = vmatprep.subr.mxu0 0.0
      %855 = vmatpush1.msra.mxu0 0.0
      %856 = vmatprep.subr.mxu0 0.0
      %857 = vmatpush1.msra.mxu0 0.0
      %858 = vmatprep.subr.mxu0 0.0
      %859 = vmatpush1.msra.mxu0 0.0
      %860 = vmatprep.subr.mxu0 0.0
      %861 = vmatpush1.msra.mxu0 0.0
      %862 = vmatprep.subr.mxu0 0.0
      %863 = vmatpush1.msra.mxu0 0.0
      %864 = vmatprep.subr.mxu0 0.0
      %865 = vmatpush1.msra.mxu0 0.0
      %866 = vmatprep.subr.mxu0 0.0
      %867 = vmatpush1.msra.mxu0 0.0
      %868 = vmatprep.subr.mxu0 0.0
      %869 = vmatpush1.msra.mxu0 0.0
      %870 = vmatprep.subr.mxu0 0.0
      %871 = vmatpush1.msra.mxu0 0.0
      %872 = vmatprep.subr.mxu0 0.0
      %873 = vmatpush1.msra.mxu0 0.0
      %874 = vmatprep.subr.mxu0 0.0
      %875 = vmatpush1.msra.mxu0 0.0
      %876 = vmatprep.subr.mxu0 0.0
      %877 = vmatpush1.msra.mxu0 0.0
      %878 = vmatprep.subr.mxu0 0.0
      %879 = vmatpush1.msra.mxu0 0.0
      %880 = vmatprep.subr.mxu0 0.0
      %881 = vmatpush1.msra.mxu0 0.0
      %882 = vmatprep.subr.mxu0 0.0
      %883 = vmatpush1.msra.mxu0 0.0
      %884 = vmatprep.subr.mxu0 0.0
      %885 = vmatpush1.msra.mxu0 0.0
      %886 = vmatprep.subr.mxu0 0.0
      %887 = vmatpush1.msra.mxu0 0.0
      %888 = vmatprep.mubr.f32.mxu0 0.0
      %v889 = vand.u32 %v738, 4294901760
      %890 = vmatmul.mubr.f32.gmra.mrb[0].mxu0 %v889
      %v891 = vpop.f32.mrb[0].mxu0
      %v892 = vadd.f32 %v816, %v891
      %v893 = vpop.f32.mrb[0].mxu0
      %894 = vdwg.mxu0
      %895 = vmatprep.subr.mxu0 0.0
      %v896 = vand.u32 %v741, 4294901760
      %v897 = vsub.f32 %v741, %v896
      %898 = vmatpush1.msra.mxu0 %v897
      %899 = vmatprep.subr.mxu0 0.0
      %900 = vmatpush1.msra.mxu0 0.0
      %901 = vmatprep.subr.mxu0 0.0
      %902 = vmatpush1.msra.mxu0 0.0
      %903 = vmatprep.subr.mxu0 0.0
      %904 = vmatpush1.msra.mxu0 0.0
      %905 = vmatprep.subr.mxu0 0.0
      %906 = vmatpush1.msra.mxu0 0.0
      %907 = vmatprep.subr.mxu0 0.0
      %908 = vmatpush1.msra.mxu0 0.0
      %909 = vmatprep.subr.mxu0 0.0
      %910 = vmatpush1.msra.mxu0 0.0
      %911 = vmatprep.subr.mxu0 0.0
      %912 = vmatpush1.msra.mxu0 0.0
      %913 = vmatprep.subr.mxu0 0.0
      %914 = vmatpush1.msra.mxu0 0.0
      %915 = vmatprep.subr.mxu0 0.0
      %916 = vmatpush1.msra.mxu0 0.0
      %917 = vmatprep.subr.mxu0 0.0
      %918 = vmatpush1.msra.mxu0 0.0
      %919 = vmatprep.subr.mxu0 0.0
      %920 = vmatpush1.msra.mxu0 0.0
      %921 = vmatprep.subr.mxu0 0.0
      %922 = vmatpush1.msra.mxu0 0.0
      %923 = vmatprep.subr.mxu0 0.0
      %924 = vmatpush1.msra.mxu0 0.0
      %925 = vmatprep.subr.mxu0 0.0
      %926 = vmatpush1.msra.mxu0 0.0
      %927 = vmatprep.subr.mxu0 0.0
      %928 = vmatpush1.msra.mxu0 0.0
      %929 = vmatprep.subr.mxu0 0.0
      %930 = vmatpush1.msra.mxu0 0.0
      %931 = vmatprep.subr.mxu0 0.0
      %932 = vmatpush1.msra.mxu0 0.0
      %933 = vmatprep.subr.mxu0 0.0
      %934 = vmatpush1.msra.mxu0 0.0
      %935 = vmatprep.subr.mxu0 0.0
      %936 = vmatpush1.msra.mxu0 0.0
      %937 = vmatprep.subr.mxu0 0.0
      %938 = vmatpush1.msra.mxu0 0.0
      %939 = vmatprep.subr.mxu0 0.0
      %940 = vmatpush1.msra.mxu0 0.0
      %941 = vmatprep.subr.mxu0 0.0
      %942 = vmatpush1.msra.mxu0 0.0
      %943 = vmatprep.subr.mxu0 0.0
      %944 = vmatpush1.msra.mxu0 0.0
      %945 = vmatprep.subr.mxu0 0.0
      %946 = vmatpush1.msra.mxu0 0.0
      %947 = vmatprep.subr.mxu0 0.0
      %948 = vmatpush1.msra.mxu0 0.0
      %949 = vmatprep.subr.mxu0 0.0
      %950 = vmatpush1.msra.mxu0 0.0
      %951 = vmatprep.subr.mxu0 0.0
      %952 = vmatpush1.msra.mxu0 0.0
      %953 = vmatprep.subr.mxu0 0.0
      %954 = vmatpush1.msra.mxu0 0.0
      %955 = vmatprep.subr.mxu0 0.0
      %956 = vmatpush1.msra.mxu0 0.0
      %957 = vmatprep.subr.mxu0 0.0
      %958 = vmatpush1.msra.mxu0 0.0
      %959 = vmatprep.subr.mxu0 0.0
      %960 = vmatpush1.msra.mxu0 0.0
      %961 = vmatprep.mubr.f32.mxu0 0.0
      %v962 = vand.u32 %v738, 4294901760
      %v963 = vsub.f32 %v738, %v962
      %964 = vmatmul.mubr.f32.gmra.mrb[0].mxu0 %v963
      %v965 = vpop.f32.mrb[0].mxu0
      %v966 = vadd.f32 %v892, %v965
      %v967 = vpop.f32.mrb[0].mxu0
      %968 = vdwg.mxu0
      %969 = vmatprep.subr.mxu0 0.0
      %v970 = vand.u32 %v741, 4294901760
      %971 = vmatpush1.msra.mxu0 %v970
      %972 = vmatprep.subr.mxu0 0.0
      %973 = vmatpush1.msra.mxu0 0.0
      %974 = vmatprep.subr.mxu0 0.0
      %975 = vmatpush1.msra.mxu0 0.0
      %976 = vmatprep.subr.mxu0 0.0
      %977 = vmatpush1.msra.mxu0 0.0
      %978 = vmatprep.subr.mxu0 0.0
      %979 = vmatpush1.msra.mxu0 0.0
      %980 = vmatprep.subr.mxu0 0.0
      %981 = vmatpush1.msra.mxu0 0.0
      %982 = vmatprep.subr.mxu0 0.0
      %983 = vmatpush1.msra.mxu0 0.0
      %984 = vmatprep.subr.mxu0 0.0
      %985 = vmatpush1.msra.mxu0 0.0
      %986 = vmatprep.subr.mxu0 0.0
      %987 = vmatpush1.msra.mxu0 0.0
      %988 = vmatprep.subr.mxu0 0.0
      %989 = vmatpush1.msra.mxu0 0.0
      %990 = vmatprep.subr.mxu0 0.0
      %991 = vmatpush1.msra.mxu0 0.0
      %992 = vmatprep.subr.mxu0 0.0
      %993 = vmatpush1.msra.mxu0 0.0
      %994 = vmatprep.subr.mxu0 0.0
      %995 = vmatpush1.msra.mxu0 0.0
      %996 = vmatprep.subr.mxu0 0.0
      %997 = vmatpush1.msra.mxu0 0.0
      %998 = vmatprep.subr.mxu0 0.0
      %999 = vmatpush1.msra.mxu0 0.0
      %1000 = vmatprep.subr.mxu0 0.0
      %1001 = vmatpush1.msra.mxu0 0.0
      %1002 = vmatprep.subr.mxu0 0.0
      %1003 = vmatpush1.msra.mxu0 0.0
      %1004 = vmatprep.subr.mxu0 0.0
      %1005 = vmatpush1.msra.mxu0 0.0
      %1006 = vmatprep.subr.mxu0 0.0
      %1007 = vmatpush1.msra.mxu0 0.0
      %1008 = vmatprep.subr.mxu0 0.0
      %1009 = vmatpush1.msra.mxu0 0.0
      %1010 = vmatprep.subr.mxu0 0.0
      %1011 = vmatpush1.msra.mxu0 0.0
      %1012 = vmatprep.subr.mxu0 0.0
      %1013 = vmatpush1.msra.mxu0 0.0
      %1014 = vmatprep.subr.mxu0 0.0
      %1015 = vmatpush1.msra.mxu0 0.0
      %1016 = vmatprep.subr.mxu0 0.0
      %1017 = vmatpush1.msra.mxu0 0.0
      %1018 = vmatprep.subr.mxu0 0.0
      %1019 = vmatpush1.msra.mxu0 0.0
      %1020 = vmatprep.subr.mxu0 0.0
      %1021 = vmatpush1.msra.mxu0 0.0
      %1022 = vmatprep.subr.mxu0 0.0
      %1023 = vmatpush1.msra.mxu0 0.0
      %1024 = vmatprep.subr.mxu0 0.0
      %1025 = vmatpush1.msra.mxu0 0.0
      %1026 = vmatprep.subr.mxu0 0.0
      %1027 = vmatpush1.msra.mxu0 0.0
      %1028 = vmatprep.subr.mxu0 0.0
      %1029 = vmatpush1.msra.mxu0 0.0
      %1030 = vmatprep.subr.mxu0 0.0
      %1031 = vmatpush1.msra.mxu0 0.0
      %1032 = vmatprep.subr.mxu0 0.0
      %1033 = vmatpush1.msra.mxu0 0.0
      %1034 = vmatprep.mubr.f32.mxu0 0.0
      %v1035 = vand.u32 %v738, 4294901760
      %v1036 = vsub.f32 %v738, %v1035
      %v1037 = vand.u32 %v1036, 4294901760
      %1038 = vmatmul.mubr.f32.gmra.mrb[0].mxu0 %v1037
      %v1039 = vpop.f32.mrb[0].mxu0
      %v1040 = vadd.f32 %v966, %v1039
      %v1041 = vpop.f32.mrb[0].mxu0
      %1042 = vdwg.mxu0
      %1043 = vmatprep.subr.mxu0 0.0
      %v1044 = vand.u32 %v741, 4294901760
      %v1045 = vsub.f32 %v741, %v1044
      %v1046 = vand.u32 %v1045, 4294901760
      %1047 = vmatpush1.msra.mxu0 %v1046
      %1048 = vmatprep.subr.mxu0 0.0
      %1049 = vmatpush1.msra.mxu0 0.0
      %1050 = vmatprep.subr.mxu0 0.0
      %1051 = vmatpush1.msra.mxu0 0.0
      %1052 = vmatprep.subr.mxu0 0.0
      %1053 = vmatpush1.msra.mxu0 0.0
      %1054 = vmatprep.subr.mxu0 0.0
      %1055 = vmatpush1.msra.mxu0 0.0
      %1056 = vmatprep.subr.mxu0 0.0
      %1057 = vmatpush1.msra.mxu0 0.0
      %1058 = vmatprep.subr.mxu0 0.0
      %1059 = vmatpush1.msra.mxu0 0.0
      %1060 = vmatprep.subr.mxu0 0.0
      %1061 = vmatpush1.msra.mxu0 0.0
      %1062 = vmatprep.subr.mxu0 0.0
      %1063 = vmatpush1.msra.mxu0 0.0
      %1064 = vmatprep.subr.mxu0 0.0
      %1065 = vmatpush1.msra.mxu0 0.0
      %1066 = vmatprep.subr.mxu0 0.0
      %1067 = vmatpush1.msra.mxu0 0.0
      %1068 = vmatprep.subr.mxu0 0.0
      %1069 = vmatpush1.msra.mxu0 0.0
      %1070 = vmatprep.subr.mxu0 0.0
      %1071 = vmatpush1.msra.mxu0 0.0
      %1072 = vmatprep.subr.mxu0 0.0
      %1073 = vmatpush1.msra.mxu0 0.0
      %1074 = vmatprep.subr.mxu0 0.0
      %1075 = vmatpush1.msra.mxu0 0.0
      %1076 = vmatprep.subr.mxu0 0.0
      %1077 = vmatpush1.msra.mxu0 0.0
      %1078 = vmatprep.subr.mxu0 0.0
      %1079 = vmatpush1.msra.mxu0 0.0
      %1080 = vmatprep.subr.mxu0 0.0
      %1081 = vmatpush1.msra.mxu0 0.0
      %1082 = vmatprep.subr.mxu0 0.0
      %1083 = vmatpush1.msra.mxu0 0.0
      %1084 = vmatprep.subr.mxu0 0.0
      %1085 = vmatpush1.msra.mxu0 0.0
      %1086 = vmatprep.subr.mxu0 0.0
      %1087 = vmatpush1.msra.mxu0 0.0
      %1088 = vmatprep.subr.mxu0 0.0
      %1089 = vmatpush1.msra.mxu0 0.0
      %1090 = vmatprep.subr.mxu0 0.0
      %1091 = vmatpush1.msra.mxu0 0.0
      %1092 = vmatprep.subr.mxu0 0.0
      %1093 = vmatpush1.msra.mxu0 0.0
      %1094 = vmatprep.subr.mxu0 0.0
      %1095 = vmatpush1.msra.mxu0 0.0
      %1096 = vmatprep.subr.mxu0 0.0
      %1097 = vmatpush1.msra.mxu0 0.0
      %1098 = vmatprep.subr.mxu0 0.0
      %1099 = vmatpush1.msra.mxu0 0.0
      %1100 = vmatprep.subr.mxu0 0.0
      %1101 = vmatpush1.msra.mxu0 0.0
      %1102 = vmatprep.subr.mxu0 0.0
      %1103 = vmatpush1.msra.mxu0 0.0
      %1104 = vmatprep.subr.mxu0 0.0
      %1105 = vmatpush1.msra.mxu0 0.0
      %1106 = vmatprep.subr.mxu0 0.0
      %1107 = vmatpush1.msra.mxu0 0.0
      %1108 = vmatprep.subr.mxu0 0.0
      %1109 = vmatpush1.msra.mxu0 0.0
      %1110 = vmatprep.mubr.f32.mxu0 0.0
      %v1111 = vand.u32 %v738, 4294901760
      %1112 = vmatmul.mubr.f32.gmra.mrb[0].mxu0 %v1111
      %v1113 = vpop.f32.mrb[0].mxu0
      %v1114 = vadd.f32 %v1040, %v1113
      %v1115 = vpop.f32.mrb[0].mxu0
      %1116 = vdwg.mxu0
      %1117 = vmatprep.subr.mxu0 0.0
      %v1118 = vand.u32 %v741, 4294901760
      %1119 = vmatpush1.msra.mxu0 %v1118
      %1120 = vmatprep.subr.mxu0 0.0
      %1121 = vmatpush1.msra.mxu0 0.0
      %1122 = vmatprep.subr.mxu0 0.0
      %1123 = vmatpush1.msra.mxu0 0.0
      %1124 = vmatprep.subr.mxu0 0.0
      %1125 = vmatpush1.msra.mxu0 0.0
      %1126 = vmatprep.subr.mxu0 0.0
      %1127 = vmatpush1.msra.mxu0 0.0
      %1128 = vmatprep.subr.mxu0 0.0
      %1129 = vmatpush1.msra.mxu0 0.0
      %1130 = vmatprep.subr.mxu0 0.0
      %1131 = vmatpush1.msra.mxu0 0.0
      %1132 = vmatprep.subr.mxu0 0.0
      %1133 = vmatpush1.msra.mxu0 0.0
      %1134 = vmatprep.subr.mxu0 0.0
      %1135 = vmatpush1.msra.mxu0 0.0
      %1136 = vmatprep.subr.mxu0 0.0
      %1137 = vmatpush1.msra.mxu0 0.0
      %1138 = vmatprep.subr.mxu0 0.0
      %1139 = vmatpush1.msra.mxu0 0.0
      %1140 = vmatprep.subr.mxu0 0.0
      %1141 = vmatpush1.msra.mxu0 0.0
      %1142 = vmatprep.subr.mxu0 0.0
      %1143 = vmatpush1.msra.mxu0 0.0
      %1144 = vmatprep.subr.mxu0 0.0
      %1145 = vmatpush1.msra.mxu0 0.0
      %1146 = vmatprep.subr.mxu0 0.0
      %1147 = vmatpush1.msra.mxu0 0.0
      %1148 = vmatprep.subr.mxu0 0.0
      %1149 = vmatpush1.msra.mxu0 0.0
      %1150 = vmatprep.subr.mxu0 0.0
      %1151 = vmatpush1.msra.mxu0 0.0
      %1152 = vmatprep.subr.mxu0 0.0
      %1153 = vmatpush1.msra.mxu0 0.0
      %1154 = vmatprep.subr.mxu0 0.0
      %1155 = vmatpush1.msra.mxu0 0.0
      %1156 = vmatprep.subr.mxu0 0.0
      %1157 = vmatpush1.msra.mxu0 0.0
      %1158 = vmatprep.subr.mxu0 0.0
      %1159 = vmatpush1.msra.mxu0 0.0
      %1160 = vmatprep.subr.mxu0 0.0
      %1161 = vmatpush1.msra.mxu0 0.0
      %1162 = vmatprep.subr.mxu0 0.0
      %1163 = vmatpush1.msra.mxu0 0.0
      %1164 = vmatprep.subr.mxu0 0.0
      %1165 = vmatpush1.msra.mxu0 0.0
      %1166 = vmatprep.subr.mxu0 0.0
      %1167 = vmatpush1.msra.mxu0 0.0
      %1168 = vmatprep.subr.mxu0 0.0
      %1169 = vmatpush1.msra.mxu0 0.0
      %1170 = vmatprep.subr.mxu0 0.0
      %1171 = vmatpush1.msra.mxu0 0.0
      %1172 = vmatprep.subr.mxu0 0.0
      %1173 = vmatpush1.msra.mxu0 0.0
      %1174 = vmatprep.subr.mxu0 0.0
      %1175 = vmatpush1.msra.mxu0 0.0
      %1176 = vmatprep.subr.mxu0 0.0
      %1177 = vmatpush1.msra.mxu0 0.0
      %1178 = vmatprep.subr.mxu0 0.0
      %1179 = vmatpush1.msra.mxu0 0.0
      %1180 = vmatprep.subr.mxu0 0.0
      %1181 = vmatpush1.msra.mxu0 0.0
      %1182 = vmatprep.mubr.f32.mxu0 0.0
      %v1183 = vand.u32 %v738, 4294901760
      %1184 = vmatmul.mubr.f32.gmra.mrb[0].mxu0 %v1183
      %v1185 = vpop.f32.mrb[0].mxu0
      %v1186 = vadd.f32 %v1114, %v1185
      %v1187 = vpop.f32.mrb[0].mxu0
      %1188 = vdwg.mxu0
      %v1189 = vld [vmem:[%s4] sm:$0xff]
      %1191 = vset.pattern.permute.xlu0 0
      %1192 = vperm.xlu0 %1191, %v1189
      %v1193 = vpop.permute.xlu0 %1192
      %v1195 = vadd.f32 %v1186, %v1193
      %v1196 = vmul.f32 %v1195, %v1195
      %v1198 = vrot.slane %v1196, 4
      %v1200 = vadd.f32 %v1196, %v1198
      %v1201 = vadd.f32 %v1200, 1e-08
      %v1202 = vrsqrt.pop %v1201
      %v1203 = vmul.f32 %v1201, %v1202
      %vm1204 = vcmp.eq.f32.partialorder %v1201, inf
      %v1205 = vsel %vm1204, %v1201, %v1203
      %vm1206 = vcmp.eq.f32.partialorder %v1201, 0.0
      %v1207 = vand.u32 %v1201, 2147483648
      %v1208 = vsel %vm1206, %v1207, %v1205
      %1209 = vst [vmem:[%s278] sm:$0xf] %v1208
      %p1210 = scmp.lt.s32.totalorder %s20, 1
      %s1211 = scalar_select %p1210, %s20, 1
      %p1212 = scmp.lt.s32.totalorder %s21, 0
      %s1213 = scalar_select %p1212, %s21, 0
      %s1214 = sadd.s32 %s1213, %s1211
      %s1215 = smul.addr %s1214, 4
      %s1216 = scalar_lea.vmem %s5, %s1215
      // Predicated region
      $region41: #{complex_linear_projection.1} parent=39 // pred_check
        %p1217 = pneg %p167
      $region42: #{complex_linear_projection.1} parent=39 // pred_check_branch
        %1219 = sbr.rel (%p1217) target = $region44
      $region43: #{complex_linear_projection.1} parent=39 // pred_region
        _
      $region44: #{complex_linear_projection.1} parent=39 // pred_fallthru
        _
    $region40: #{complex_linear_projection.1} parent=5 // pred_fallthru
      _
    %p1220 = scmp.le.s32.totalorder 2, %s11
    // Predicated region
    $region45: #{complex_linear_projection.1} parent=5 // pred_check
      %p1221 = pneg %p1220
    $region46: #{complex_linear_projection.1} parent=5 // pred_check_branch
      %1223 = sbr.rel (%p1221) target = $region48
    $region47: #{complex_linear_projection.1} parent=5 // pred_region
      %s1224 = ssub.s32 %s11, 2
      // Predicated region
      $region49: #{complex_linear_projection.1} parent=47 // pred_check
        %p1225 = pneg %p173
      $region50: #{complex_linear_projection.1} parent=47 // pred_check_branch
        %1227 = sbr.rel (%p1225) target = $region52
      $region51: #{complex_linear_projection.1} parent=47 // pred_region
        %p1228 = scmp.lt.s32.totalorder %s22, 1
        %s1229 = scalar_select %p1228, %s22, 1
        %p1230 = scmp.lt.s32.totalorder %s23, 0
        %s1231 = scalar_select %p1230, %s23, 0
        %s1232 = sadd.s32 %s1231, %s1229
        %s1233 = smul.addr %s1232, 4
        %s1234 = scalar_lea.vmem %s5, %s1233
      $region52: #{complex_linear_projection.1} parent=47 // pred_fallthru
        _
    $region48: #{complex_linear_projection.1} parent=5 // pred_fallthru
      _
  $region6: #{complex_linear_projection.1} parent=0 // loop_footer
    %s15 = sadd.s32 1, %s11
  $region7: #{complex_linear_projection.1} parent=0 // loop_footer_branch
    %10 = sbr.rel target = $region3
  $region8: #{complex_linear_projection.1} parent=0 // loop_exit
    _

</llo_original>
